<compile_context>
chip_gen: v6e
topology: v6e:2x2x1
jax: 0.10.0
libtpu: 0.0.40
codegen_flags: <defaults>
</compile_context>

<pallas_src>
import functools

import jax
import jax.numpy as jnp
from jax import lax
from jax.experimental import pallas as pl
from jax.experimental.pallas import tpu as pltpu


def _dsconv_kernel(x_ref, weff_ref, par_ref, o_ref, *, W, HW, NbCin, NbCout):
    # x_ref   : (NbCin, HW)      Nb images packed on sublanes, H*W flat on lanes
    # weff_ref: (9, NbCin, HW)   effective depthwise taps (BN1 scale + boundary
    #                            masks folded in), tap index t = (dy+1)*3+(dx+1)
    # par_ref : (R, NbCin+2)     [:NbCout,:NbCin] block-diag pointwise W * BN2 scale
    #                            [:NbCout, NbCin] BN2 bias, [:NbCin, NbCin+1] BN1 bias
    # o_ref   : (NbCout, HW)     flat (image-major) output, lane-dense stores
    x = x_ref[...]

    # ---- depthwise 3x3: 9 taps as static XLU rolls of the flat lane axis ----
    # roll wraps within each (image, channel) row; wrapped (out-of-image)
    # contributions are zeroed because the boundary mask is baked into weff.
    acc = x * weff_ref[4]                                   # center tap (dy=dx=0)
    t = 0
    for dy in (-1, 0, 1):
        for dx in (-1, 0, 1):
            off = dy * W + dx
            if off != 0:
                shifted = pltpu.roll(x, shift=(-off) % HW, axis=1)
                acc = acc + shifted * weff_ref[t]
            t += 1

    # ---- BN1 bias + ReLU (scale already folded into the taps) ----
    b1 = par_ref[:NbCin, NbCin + 1:NbCin + 2]               # (NbCin, 1)
    a = jnp.maximum(acc + b1, 0.0)

    # ---- pointwise 1x1 conv: ONE block-diagonal matmul over all Nb images ----
    pw = par_ref[:NbCout, :NbCin]                           # (NbCout, NbCin)
    b2 = par_ref[:NbCout, NbCin:NbCin + 1]                  # (NbCout, 1)
    p = jnp.dot(pw, a, preferred_element_type=jnp.float32)  # (NbCout, HW)

    # ---- BN2 bias + ReLU, lane-dense (multiple-of-128) unmasked store ----
    o_ref[...] = jnp.maximum(p + b2, 0.0).astype(o_ref.dtype)


@functools.partial(jax.jit, static_argnames=("cout",))
def depth_separable_conv2d(x_nchw, w_eff, params, *, cout):
    """x_nchw: (N, Cin, H, W).  w_eff: (9, Nb*Cin, H*W).  params: (R, Nb*Cin+2).
    Returns (N, cout, H, W) float32."""
    N, Cin, H, W = x_nchw.shape
    HW = H * W
    NbCin = w_eff.shape[1]
    Nb = NbCin // Cin
    NbCout = Nb * cout
    assert N % Nb == 0, "batch must be a multiple of the per-step image count"
    nblk = N // Nb

    x_flat = x_nchw.reshape(N * Cin, HW)    # free view of contiguous NCHW memory

    kernel = functools.partial(_dsconv_kernel, W=W, HW=HW,
                               NbCin=NbCin, NbCout=NbCout)

    out_flat = pl.pallas_call(
        kernel,
        out_shape=jax.ShapeDtypeStruct((N * cout, HW), jnp.float32),
        grid_spec=pltpu.PrefetchScalarGridSpec(
            num_scalar_prefetch=0,
            grid=(nblk,),
            in_specs=[
                pl.BlockSpec((NbCin, HW), lambda b: (b, 0)),
                pl.BlockSpec((9, NbCin, HW), lambda b: (0, 0, 0)),   # resident
                pl.BlockSpec(params.shape, lambda b: (0, 0)),        # resident
            ],
            out_specs=pl.BlockSpec((NbCout, HW), lambda b: (b, 0)),
        ),
        compiler_params=pltpu.CompilerParams(
            dimension_semantics=("parallel",),
        ),
    )(x_flat, w_eff, params)

    return out_flat.reshape(N, cout, H, W)


def _fold_bn(gamma, beta, mean, var, eps=1e-5):
    scale = gamma / jnp.sqrt(var + eps)
    bias = beta - mean * scale
    return scale, bias


def prepare_dsconv_params(dw_w_oihw, bn1, pw_w_oihw, bn2, *, Nb, H, W, eps=1e-5):
    """Host-side weight prep (traced once, tiny arrays):
    - fold BN1 scale + image-boundary masks into (9, Nb*Cin, H*W) depthwise taps,
    - fold BN2 scale into a block-diagonal (Nb*Cout, Nb*Cin) pointwise weight,
    - pack pointwise weight + both biases into one small param slab."""
    Cin = dw_w_oihw.shape[0]
    Cout = pw_w_oihw.shape[0]
    HW = H * W

    g1, bt1, m1, v1 = bn1
    g2, bt2, m2, v2 = bn2
    s1, b1 = _fold_bn(g1, bt1, m1, v1, eps)
    s2, b2 = _fold_bn(g2, bt2, m2, v2, eps)

    taps = dw_w_oihw[:, 0] * s1[:, None, None]              # (Cin, 3, 3), BN1 scale folded
    yy, xx = jnp.meshgrid(jnp.arange(H), jnp.arange(W), indexing="ij")
    yy = yy.reshape(HW)
    xx = xx.reshape(HW)
    w_eff = []
    for dy in (-1, 0, 1):
        for dx in (-1, 0, 1):
            valid = ((yy + dy >= 0) & (yy + dy < H)
                     & (xx + dx >= 0) & (xx + dx < W)).astype(jnp.float32)      # (HW,)
            w_eff.append(taps[:, dy + 1, dx + 1][:, None] * valid[None, :])      # (Cin, HW)
    w_eff = jnp.tile(jnp.stack(w_eff, axis=0), (1, Nb, 1))   # (9, Nb*Cin, HW)

    pw = pw_w_oihw[:, :, 0, 0] * s2[:, None]                 # (Cout, Cin), BN2 scale folded
    pw_bd = jnp.kron(jnp.eye(Nb, dtype=pw.dtype), pw)        # (Nb*Cout, Nb*Cin) block diag

    NbCin, NbCout = Nb * Cin, Nb * Cout
    rows = max(NbCin, NbCout)
    params = jnp.zeros((rows, NbCin + 2), jnp.float32)
    params = params.at[:NbCout, :NbCin].set(pw_bd)
    params = params.at[:NbCout, NbCin].set(jnp.tile(b2, (Nb,)))
    params = params.at[:NbCin, NbCin + 1].set(jnp.tile(b1, (Nb,)))
    return w_eff, params


def _reference(x_nchw, dw_w_oihw, s1, b1, pw_w_oihw, s2, b2):
    """Pure-JAX reference (lax conv), NCHW, for correctness check."""
    Cin = x_nchw.shape[1]
    y = lax.conv_general_dilated(
        x_nchw, dw_w_oihw, window_strides=(1, 1), padding=((1, 1), (1, 1)),
        feature_group_count=Cin,
        dimension_numbers=("NCHW", "OIHW", "NCHW"),
        precision=lax.Precision.HIGHEST)
    y = y * s1[None, :, None, None] + b1[None, :, None, None]
    y = jnp.maximum(y, 0.0)
    z = lax.conv_general_dilated(
        y, pw_w_oihw, window_strides=(1, 1), padding=((0, 0), (0, 0)),
        dimension_numbers=("NCHW", "OIHW", "NCHW"),
        precision=lax.Precision.HIGHEST)
    z = z * s2[None, :, None, None] + b2[None, :, None, None]
    return jnp.maximum(z, 0.0)


if __name__ == "__main__":
    N, Cin, Cout, H, W = 2, 4, 8, 16, 16
    Nb = 2   # images per grid step (whole batch here); Nb*Cin = 8 fills f32 sublanes

    key = jax.random.PRNGKey(0)
    k_x, k_dw, k_pw, k_g1, k_b1, k_m1, k_v1, k_g2, k_b2, k_m2, k_v2 = (
        jax.random.split(key, 11))

    x = jax.random.normal(k_x, (N, Cin, H, W), jnp.float32)

    # Depthwise weight, PyTorch shape (Cin, 1, 3, 3); pointwise (Cout, Cin, 1, 1).
    dw_w_oihw = jax.random.normal(k_dw, (Cin, 1, 3, 3), jnp.float32) * 0.3
    pw_w_oihw = jax.random.normal(k_pw, (Cout, Cin, 1, 1), jnp.float32) * 0.3

    # Deterministic BatchNorm parameters (inference mode).
    g1 = 1.0 + 0.1 * jax.random.normal(k_g1, (Cin,), jnp.float32)
    bb1 = 0.1 * jax.random.normal(k_b1, (Cin,), jnp.float32)
    m1 = 0.1 * jax.random.normal(k_m1, (Cin,), jnp.float32)
    v1 = 1.0 + 0.1 * jax.random.uniform(k_v1, (Cin,), jnp.float32)
    g2 = 1.0 + 0.1 * jax.random.normal(k_g2, (Cout,), jnp.float32)
    bb2 = 0.1 * jax.random.normal(k_b2, (Cout,), jnp.float32)
    m2 = 0.1 * jax.random.normal(k_m2, (Cout,), jnp.float32)
    v2 = 1.0 + 0.1 * jax.random.uniform(k_v2, (Cout,), jnp.float32)

    # Kernel-layout parameters (all BN folding / masking done host-side).
    w_eff, params = prepare_dsconv_params(
        dw_w_oihw, (g1, bb1, m1, v1), pw_w_oihw, (g2, bb2, m2, v2),
        Nb=Nb, H=H, W=W)

    out = depth_separable_conv2d(x, w_eff, params, cout=Cout)
    out = jax.block_until_ready(out)

    s1, b1 = _fold_bn(g1, bb1, m1, v1)
    s2, b2 = _fold_bn(g2, bb2, m2, v2)
    ref = _reference(x, dw_w_oihw, s1, b1, pw_w_oihw, s2, b2)

    assert out.shape == (N, Cout, H, W)
    max_err = float(jnp.max(jnp.abs(out - ref)))
    assert jnp.allclose(out, ref, rtol=1e-5, atol=2e-5), max_err

    print("KERNEL_OK")
</pallas_src>

<mosaic_0001>
module attributes {stable_mosaic.version = 11 : i64} {
  func.func @_dsconv_kernel(%arg0: i32, %arg1: memref<8x256xf32, #tpu.memory_space<vmem>>, %arg2: memref<9x8x256xf32, #tpu.memory_space<vmem>>, %arg3: memref<16x10xf32, #tpu.memory_space<vmem>>, %arg4: memref<16x256xf32, #tpu.memory_space<vmem>>) attributes {dimension_semantics = [#tpu.dimension_semantics<parallel>], iteration_bounds = array<i64: 1>, scalar_prefetch = 0 : i64, scratch_operands = 0 : i64, tpu.core_type = #tpu.core_type<tc>, window_params = [{transform_indices = @transform_0, window_bounds = array<i64: 8, 256>}, {pipeline_mode = #tpu.pipeline_mode<synchronous>, transform_indices = @transform_1, window_bounds = array<i64: 9, 8, 256>}, {pipeline_mode = #tpu.pipeline_mode<synchronous>, transform_indices = @transform_2, window_bounds = array<i64: 16, 10>}, {transform_indices = @transform_3, window_bounds = array<i64: 16, 256>}]} {
    %c0 = arith.constant 0 : index
    %c0_0 = arith.constant 0 : index
    %0 = vector.load %arg1[%c0, %c0_0] : memref<8x256xf32, #tpu.memory_space<vmem>>, vector<8x256xf32>
    %c4 = arith.constant 4 : index
    %c0_1 = arith.constant 0 : index
    %c0_2 = arith.constant 0 : index
    %1 = vector.load %arg2[%c4, %c0_1, %c0_2] : memref<9x8x256xf32, #tpu.memory_space<vmem>>, vector<1x8x256xf32>
    %2 = vector.shape_cast %1 : vector<1x8x256xf32> to vector<8x256xf32>
    %3 = arith.mulf %0, %2 : vector<8x256xf32>
    %c17_i32 = arith.constant 17 : i32
    %4 = tpu.dynamic_rotate %0 by %c17_i32 dim 1 : vector<8x256xf32>, i32 -> vector<8x256xf32>
    %c0_3 = arith.constant 0 : index
    %c0_4 = arith.constant 0 : index
    %c0_5 = arith.constant 0 : index
    %5 = vector.load %arg2[%c0_3, %c0_4, %c0_5] : memref<9x8x256xf32, #tpu.memory_space<vmem>>, vector<1x8x256xf32>
    %6 = vector.shape_cast %5 : vector<1x8x256xf32> to vector<8x256xf32>
    %7 = arith.mulf %4, %6 : vector<8x256xf32>
    %8 = arith.addf %3, %7 : vector<8x256xf32>
    %c16_i32 = arith.constant 16 : i32
    %9 = tpu.dynamic_rotate %0 by %c16_i32 dim 1 : vector<8x256xf32>, i32 -> vector<8x256xf32>
    %c1 = arith.constant 1 : index
    %c0_6 = arith.constant 0 : index
    %c0_7 = arith.constant 0 : index
    %10 = vector.load %arg2[%c1, %c0_6, %c0_7] : memref<9x8x256xf32, #tpu.memory_space<vmem>>, vector<1x8x256xf32>
    %11 = vector.shape_cast %10 : vector<1x8x256xf32> to vector<8x256xf32>
    %12 = arith.mulf %9, %11 : vector<8x256xf32>
    %13 = arith.addf %8, %12 : vector<8x256xf32>
    %c15_i32 = arith.constant 15 : i32
    %14 = tpu.dynamic_rotate %0 by %c15_i32 dim 1 : vector<8x256xf32>, i32 -> vector<8x256xf32>
    %c2 = arith.constant 2 : index
    %c0_8 = arith.constant 0 : index
    %c0_9 = arith.constant 0 : index
    %15 = vector.load %arg2[%c2, %c0_8, %c0_9] : memref<9x8x256xf32, #tpu.memory_space<vmem>>, vector<1x8x256xf32>
    %16 = vector.shape_cast %15 : vector<1x8x256xf32> to vector<8x256xf32>
    %17 = arith.mulf %14, %16 : vector<8x256xf32>
    %18 = arith.addf %13, %17 : vector<8x256xf32>
    %c1_i32 = arith.constant 1 : i32
    %19 = tpu.dynamic_rotate %0 by %c1_i32 dim 1 : vector<8x256xf32>, i32 -> vector<8x256xf32>
    %c3 = arith.constant 3 : index
    %c0_10 = arith.constant 0 : index
    %c0_11 = arith.constant 0 : index
    %20 = vector.load %arg2[%c3, %c0_10, %c0_11] : memref<9x8x256xf32, #tpu.memory_space<vmem>>, vector<1x8x256xf32>
    %21 = vector.shape_cast %20 : vector<1x8x256xf32> to vector<8x256xf32>
    %22 = arith.mulf %19, %21 : vector<8x256xf32>
    %23 = arith.addf %18, %22 : vector<8x256xf32>
    %c255_i32 = arith.constant 255 : i32
    %24 = tpu.dynamic_rotate %0 by %c255_i32 dim 1 : vector<8x256xf32>, i32 -> vector<8x256xf32>
    %c5 = arith.constant 5 : index
    %c0_12 = arith.constant 0 : index
    %c0_13 = arith.constant 0 : index
    %25 = vector.load %arg2[%c5, %c0_12, %c0_13] : memref<9x8x256xf32, #tpu.memory_space<vmem>>, vector<1x8x256xf32>
    %26 = vector.shape_cast %25 : vector<1x8x256xf32> to vector<8x256xf32>
    %27 = arith.mulf %24, %26 : vector<8x256xf32>
    %28 = arith.addf %23, %27 : vector<8x256xf32>
    %c241_i32 = arith.constant 241 : i32
    %29 = tpu.dynamic_rotate %0 by %c241_i32 dim 1 : vector<8x256xf32>, i32 -> vector<8x256xf32>
    %c6 = arith.constant 6 : index
    %c0_14 = arith.constant 0 : index
    %c0_15 = arith.constant 0 : index
    %30 = vector.load %arg2[%c6, %c0_14, %c0_15] : memref<9x8x256xf32, #tpu.memory_space<vmem>>, vector<1x8x256xf32>
    %31 = vector.shape_cast %30 : vector<1x8x256xf32> to vector<8x256xf32>
    %32 = arith.mulf %29, %31 : vector<8x256xf32>
    %33 = arith.addf %28, %32 : vector<8x256xf32>
    %c240_i32 = arith.constant 240 : i32
    %34 = tpu.dynamic_rotate %0 by %c240_i32 dim 1 : vector<8x256xf32>, i32 -> vector<8x256xf32>
    %c7 = arith.constant 7 : index
    %c0_16 = arith.constant 0 : index
    %c0_17 = arith.constant 0 : index
    %35 = vector.load %arg2[%c7, %c0_16, %c0_17] : memref<9x8x256xf32, #tpu.memory_space<vmem>>, vector<1x8x256xf32>
    %36 = vector.shape_cast %35 : vector<1x8x256xf32> to vector<8x256xf32>
    %37 = arith.mulf %34, %36 : vector<8x256xf32>
    %38 = arith.addf %33, %37 : vector<8x256xf32>
    %c239_i32 = arith.constant 239 : i32
    %39 = tpu.dynamic_rotate %0 by %c239_i32 dim 1 : vector<8x256xf32>, i32 -> vector<8x256xf32>
    %c8 = arith.constant 8 : index
    %c0_18 = arith.constant 0 : index
    %c0_19 = arith.constant 0 : index
    %40 = vector.load %arg2[%c8, %c0_18, %c0_19] : memref<9x8x256xf32, #tpu.memory_space<vmem>>, vector<1x8x256xf32>
    %41 = vector.shape_cast %40 : vector<1x8x256xf32> to vector<8x256xf32>
    %42 = arith.mulf %39, %41 : vector<8x256xf32>
    %43 = arith.addf %38, %42 : vector<8x256xf32>
    %c0_20 = arith.constant 0 : index
    %c9 = arith.constant 9 : index
    %44 = vector.load %arg3[%c0_20, %c9] : memref<16x10xf32, #tpu.memory_space<vmem>>, vector<8x1xf32>
    %45 = vector.broadcast %44 : vector<8x1xf32> to vector<8x256xf32>
    %46 = arith.addf %43, %45 : vector<8x256xf32>
    %cst = arith.constant 0.000000e+00 : f32
    %47 = vector.broadcast %cst : f32 to vector<8x256xf32>
    %48 = arith.maximumf %46, %47 : vector<8x256xf32>
    %c0_21 = arith.constant 0 : index
    %c0_22 = arith.constant 0 : index
    %49 = vector.load %arg3[%c0_21, %c0_22] : memref<16x10xf32, #tpu.memory_space<vmem>>, vector<16x8xf32>
    %c0_23 = arith.constant 0 : index
    %c8_24 = arith.constant 8 : index
    %50 = vector.load %arg3[%c0_23, %c8_24] : memref<16x10xf32, #tpu.memory_space<vmem>>, vector<16x1xf32>
    %cst_25 = arith.constant dense<0.000000e+00> : vector<16x256xf32>
    %51 = tpu.matmul %49, %48, %cst_25 {dimension_numbers = #tpu.dot_dimension_numbers<[1], [0], [0], [1], [0, 0, 1, 1], [], []>} : vector<16x8xf32>, vector<8x256xf32>, vector<16x256xf32> -> vector<16x256xf32>
    %52 = vector.broadcast %50 : vector<16x1xf32> to vector<16x256xf32>
    %53 = arith.addf %51, %52 : vector<16x256xf32>
    %cst_26 = arith.constant 0.000000e+00 : f32
    %54 = vector.broadcast %cst_26 : f32 to vector<16x256xf32>
    %55 = arith.maximumf %53, %54 : vector<16x256xf32>
    %c0_27 = arith.constant 0 : index
    %c0_28 = arith.constant 0 : index
    %56 = vector.load %arg4[%c0_27, %c0_28] : memref<16x256xf32, #tpu.memory_space<vmem>>, vector<16x256xf32>
    tpu.vector_store %arg4[%c0_27, %c0_28], %55 {strides = array<i32>} : memref<16x256xf32, #tpu.memory_space<vmem>>, vector<16x256xf32>,
    return
  }
  func.func @transform_0(%arg0: i32) -> (i32, i32) {
    %c0_i32 = arith.constant 0 : i32
    %c0_i32_0 = arith.constant 0 : i32
    return %arg0, %c0_i32 : i32, i32
  }
  func.func @transform_1(%arg0: i32) -> (i32, i32, i32) {
    %c0_i32 = arith.constant 0 : i32
    %c0_i32_0 = arith.constant 0 : i32
    %c0_i32_1 = arith.constant 0 : i32
    %c0_i32_2 = arith.constant 0 : i32
    return %c0_i32, %c0_i32_0, %c0_i32_1 : i32, i32, i32
  }
  func.func @transform_2(%arg0: i32) -> (i32, i32) {
    %c0_i32 = arith.constant 0 : i32
    %c0_i32_0 = arith.constant 0 : i32
    %c0_i32_1 = arith.constant 0 : i32
    return %c0_i32, %c0_i32_0 : i32, i32
  }
  func.func @transform_3(%arg0: i32) -> (i32, i32) {
    %c0_i32 = arith.constant 0 : i32
    %c0_i32_0 = arith.constant 0 : i32
    return %arg0, %c0_i32 : i32, i32
  }
}

</mosaic_0001>

<llo_original>
// kernel: depth_separable_conv2d.1
$region0: #{depth_separable_conv2d.1}
  #allocation0 [shape = 'u32[]', space=smem, size = 0x4, offset = 0x4, fixed_abs, tag = 'smem constant byte address 0x4 - core index']
  #allocation1 [shape = 'u32[144,128]{1,0:T(1,128)}', space=vmem, size = 0x12000, scoped, tag = 'internal scratch']
  %s0 = inlined_call_operand.vmem [shape: f32[8,256], index: 0, kind: input, shape index: {}]
  %s1 = inlined_call_operand.vmem [shape: f32[9,8,256], index: 1, kind: input, shape index: {}]
  %s2 = inlined_call_operand.hbm [shape: f32[16,10], index: 2, kind: input, shape index: {}]
  %s3 = inlined_call_operand.vmem [shape: f32[16,256], index: 3, kind: output, shape index: {}]
  %s4 = sld [smem:[#allocation0]]
  $region26: #{depth_separable_conv2d.1} parent=0
    _
  %s6 = ssub.s32 1, %s4
  %s7 = scalar_select 0, %s6, %s4
  $region1: #{depth_separable_conv2d.1} parent=0
    #allocation2 [shape = 'u8[8192]{0}', space=vmem, size = 0x2000, scoped, tag = 'input window, operand 2, single buffered']
    #allocation3 [shape = 's32[1]{0}', space=sflag, size = 0x4, scoped, tag = 'scoped memory for depth_separable_conv2d.1']
    %8 = vsyncpa [#allocation3], 0
    // Predicated region
    $region2: #{depth_separable_conv2d.1} parent=1 // pred_check
      _
    $region3: #{depth_separable_conv2d.1} parent=1 // pred_check_branch
      %10 = sbr.rel (0) target = $region5
    $region4: #{depth_separable_conv2d.1} parent=1 // pred_region
      _
    $region5: #{depth_separable_conv2d.1} parent=1 // pred_fallthru
      _
    // Predicated region
    $region6: #{depth_separable_conv2d.1} parent=1 // pred_check
      _
    $region7: #{depth_separable_conv2d.1} parent=1 // pred_check_branch
      %12 = sbr.rel (0) target = $region9
    $region8: #{depth_separable_conv2d.1} parent=1 // pred_region
      _
    $region9: #{depth_separable_conv2d.1} parent=1 // pred_fallthru
      _
    // Predicated region
    $region10: #{depth_separable_conv2d.1} parent=1 // pred_check
      _
    $region11: #{depth_separable_conv2d.1} parent=1 // pred_check_branch
      %14 = sbr.rel (0) target = $region13
    $region12: #{depth_separable_conv2d.1} parent=1 // pred_region
      %s16 = ssub.s32 256, 256
      %17 = vsyncadd [#allocation3], %s16
      %s18 = sshll.u32 [#allocation2], 4
      %s19 = int_to_ptr.vmem [resolvable:$true] %s18
      %24 = dma.hbm_to_vmem [thread:$0]  %s2, 256, %s19, [#allocation3], 128, 128, 8
    $region13: #{depth_separable_conv2d.1} parent=1 // pred_fallthru
      _
    // Predicated region
    $region14: #{depth_separable_conv2d.1} parent=1 // pred_check
      _
    $region15: #{depth_separable_conv2d.1} parent=1 // pred_check_branch
      %26 = sbr.rel (0) target = $region17
    $region16: #{depth_separable_conv2d.1} parent=1 // pred_region
      %27 = dma.done [#allocation3], 256
    $region17: #{depth_separable_conv2d.1} parent=1 // pred_fallthru
      _
    %v28 = vld [vmem:[%s0] sm:$0xff]
    %v29 = vld [vmem:[%s0 + $0x8] sm:$0xff]
    %s30 = scalar_lea.vmem %s1, 64
    %v31 = vld [vmem:[%s30] sm:$0xff]
    %v32 = vld [vmem:[%s30 + $0x8] sm:$0xff]
    %v33 = vmul.f32 %v28, %v31
    %v34 = vmul.f32 %v29, %v32
    %35 = vrot.lane.b32.xlu0 %v28, 17
    %v36 = vpop.permute.xlu0 %35
    %37 = vrot.lane.b32.xlu0 %v29, 17
    %v38 = vpop.permute.xlu0 %37
    %v39 = vlaneseq
    %v40 = vand.u32 %v39, 127
    %vm41 = vcmp.lt.s32.totalorder %v40, 17
    %v42 = vsel %vm41, %v36, %v38
    %v43 = vsel %vm41, %v38, %v36
    %v44 = vld [vmem:[%s1] sm:$0xff]
    %v45 = vld [vmem:[%s1 + $0x8] sm:$0xff]
    %v46 = vmul.f32 %v43, %v44
    %v47 = vmul.f32 %v42, %v45
    %v48 = vadd.f32 %v33, %v46
    %v49 = vadd.f32 %v34, %v47
    %50 = vrot.lane.b32.xlu0 %v28, 16
    %v51 = vpop.permute.xlu0 %50
    %52 = vrot.lane.b32.xlu0 %v29, 16
    %v53 = vpop.permute.xlu0 %52
    %vm54 = vcmp.lt.s32.totalorder %v40, 16
    %v55 = vsel %vm54, %v51, %v53
    %v56 = vsel %vm54, %v53, %v51
    %s57 = scalar_lea.vmem %s1, 16
    %v58 = vld [vmem:[%s57] sm:$0xff]
    %v59 = vld [vmem:[%s57 + $0x8] sm:$0xff]
    %v60 = vmul.f32 %v56, %v58
    %v61 = vmul.f32 %v55, %v59
    %v62 = vadd.f32 %v48, %v60
    %v63 = vadd.f32 %v49, %v61
    %64 = vrot.lane.b32.xlu0 %v28, 15
    %v65 = vpop.permute.xlu0 %64
    %66 = vrot.lane.b32.xlu0 %v29, 15
    %v67 = vpop.permute.xlu0 %66
    %vm68 = vcmp.lt.s32.totalorder %v40, 15
    %v69 = vsel %vm68, %v65, %v67
    %v70 = vsel %vm68, %v67, %v65
    %s71 = scalar_lea.vmem %s1, 32
    %v72 = vld [vmem:[%s71] sm:$0xff]
    %v73 = vld [vmem:[%s71 + $0x8] sm:$0xff]
    %v74 = vmul.f32 %v70, %v72
    %v75 = vmul.f32 %v69, %v73
    %v76 = vadd.f32 %v62, %v74
    %v77 = vadd.f32 %v63, %v75
    %78 = vrot.lane.b32.xlu0 %v28, 1
    %v79 = vpop.permute.xlu0 %78
    %80 = vrot.lane.b32.xlu0 %v29, 1
    %v81 = vpop.permute.xlu0 %80
    %vm82 = vcmp.lt.s32.totalorder %v40, 1
    %v83 = vsel %vm82, %v79, %v81
    %v84 = vsel %vm82, %v81, %v79
    %s85 = scalar_lea.vmem %s1, 48
    %v86 = vld [vmem:[%s85] sm:$0xff]
    %v87 = vld [vmem:[%s85 + $0x8] sm:$0xff]
    %v88 = vmul.f32 %v84, %v86
    %v89 = vmul.f32 %v83, %v87
    %v90 = vadd.f32 %v76, %v88
    %v91 = vadd.f32 %v77, %v89
    %92 = vrot.lane.b32.xlu0 %v28, 127
    %v93 = vpop.permute.xlu0 %92
    %94 = vrot.lane.b32.xlu0 %v29, 127
    %v95 = vpop.permute.xlu0 %94
    %vm96 = vcmp.lt.s32.totalorder %v40, 127
    %v97 = vsel %vm96, %v93, %v95
    %v98 = vsel %vm96, %v95, %v93
    %s99 = scalar_lea.vmem %s1, 80
    %v100 = vld [vmem:[%s99] sm:$0xff]
    %v101 = vld [vmem:[%s99 + $0x8] sm:$0xff]
    %v102 = vmul.f32 %v97, %v100
    %v103 = vmul.f32 %v98, %v101
    %v104 = vadd.f32 %v90, %v102
    %v105 = vadd.f32 %v91, %v103
    %106 = vrot.lane.b32.xlu0 %v28, 113
    %v107 = vpop.permute.xlu0 %106
    %108 = vrot.lane.b32.xlu0 %v29, 113
    %v109 = vpop.permute.xlu0 %108
    %vm110 = vcmp.lt.s32.totalorder %v40, 113
    %v111 = vsel %vm110, %v107, %v109
    %v112 = vsel %vm110, %v109, %v107
    %s113 = scalar_lea.vmem %s1, 96
    %v114 = vld [vmem:[%s113] sm:$0xff]
    %v115 = vld [vmem:[%s113 + $0x8] sm:$0xff]
    %v116 = vmul.f32 %v111, %v114
    %v117 = vmul.f32 %v112, %v115
    %v118 = vadd.f32 %v104, %v116
    %v119 = vadd.f32 %v105, %v117
    %120 = vrot.lane.b32.xlu0 %v28, 112
    %v121 = vpop.permute.xlu0 %120
    %122 = vrot.lane.b32.xlu0 %v29, 112
    %v123 = vpop.permute.xlu0 %122
    %vm124 = vcmp.lt.s32.totalorder %v40, 112
    %v125 = vsel %vm124, %v121, %v123
    %v126 = vsel %vm124, %v123, %v121
    %s127 = scalar_lea.vmem %s1, 112
    %v128 = vld [vmem:[%s127] sm:$0xff]
    %v129 = vld [vmem:[%s127 + $0x8] sm:$0xff]
    %v130 = vmul.f32 %v125, %v128
    %v131 = vmul.f32 %v126, %v129
    %v132 = vadd.f32 %v118, %v130
    %v133 = vadd.f32 %v119, %v131
    %134 = vrot.lane.b32.xlu0 %v28, 111
    %v135 = vpop.permute.xlu0 %134
    %136 = vrot.lane.b32.xlu0 %v29, 111
    %v137 = vpop.permute.xlu0 %136
    %vm138 = vcmp.lt.s32.totalorder %v40, 111
    %v139 = vsel %vm138, %v135, %v137
    %v140 = vsel %vm138, %v137, %v135
    %s141 = scalar_lea.vmem %s1, 128
    %v142 = vld [vmem:[%s141] sm:$0xff]
    %v143 = vld [vmem:[%s141 + $0x8] sm:$0xff]
    %v144 = vmul.f32 %v139, %v142
    %v145 = vmul.f32 %v140, %v143
    %v146 = vadd.f32 %v132, %v144
    %v147 = vadd.f32 %v133, %v145
    %v148 = vld [vmem:[#allocation2] sm:$0xff]
    %150 = vset.pattern.permute.xlu0 9
    %151 = vperm.xlu0 %150, %v148
    %v152 = vpop.permute.xlu0 %151
    %v154 = vadd.f32 %v146, %v152
    %v155 = vadd.f32 %v147, %v152
    %v156 = vmax.f32 %v154, 0.0
    %v157 = vmax.f32 %v155, 0.0
    %v158 = vld [vmem:[#allocation2] sm:$0xff]
    %v159 = vld [vmem:[#allocation2 + $0x8] sm:$0xff]
    %161 = vset.pattern.permute.xlu0 8
    %162 = vperm.xlu0 %161, %v158
    %v163 = vpop.permute.xlu0 %162
    %166 = vset.pattern.permute.xlu0 8
    %167 = vperm.xlu0 %166, %v159
    %v168 = vpop.permute.xlu0 %167
    %vm170 = vcmask 64512
    %v171 = vsel %vm170, %v158, 0
    %v173 = vsel %vm170, %v159, 0
    %175 = vmatprep.subr.mxu0 0.0
    %176 = vmatpush1.msra.mxu0 0.0
    %177 = vmatprep.subr.mxu0 0.0
    %178 = vmatpush1.msra.mxu0 0.0
    %179 = vmatprep.subr.mxu0 0.0
    %180 = vmatpush1.msra.mxu0 0.0
    %181 = vmatprep.subr.mxu0 0.0
    %182 = vmatpush1.msra.mxu0 0.0
    %183 = vmatprep.subr.mxu0 0.0
    %184 = vmatpush1.msra.mxu0 0.0
    %185 = vmatprep.subr.mxu0 0.0
    %186 = vmatpush1.msra.mxu0 0.0
    %187 = vmatprep.subr.mxu0 0.0
    %188 = vmatpush1.msra.mxu0 0.0
    %189 = vmatprep.subr.mxu0 0.0
    %190 = vmatpush1.msra.mxu0 0.0
    %191 = vmatprep.subr.mxu0 0.0
    %192 = vmatpush1.msra.mxu0 0.0
    %193 = vmatprep.subr.mxu0 0.0
    %194 = vmatpush1.msra.mxu0 0.0
    %195 = vmatprep.subr.mxu0 0.0
    %196 = vmatpush1.msra.mxu0 0.0
    %197 = vmatprep.subr.mxu0 0.0
    %198 = vmatpush1.msra.mxu0 0.0
    %199 = vmatprep.subr.mxu0 0.0
    %200 = vmatpush1.msra.mxu0 0.0
    %201 = vmatprep.subr.mxu0 0.0
    %202 = vmatpush1.msra.mxu0 0.0
    %203 = vmatprep.subr.mxu0 0.0
    %204 = vmatpush1.msra.mxu0 0.0
    %205 = vmatprep.subr.mxu0 %v157
    %206 = vmatpush1.msra.mxu0 %v156
    %207 = vmatprep.subr.mxu0 0.0
    %208 = vmatpush2.msra.mxu0 0.0
    %209 = vmatprep.subr.mxu0 0.0
    %210 = vmatpush2.msra.mxu0 0.0
    %211 = vmatprep.subr.mxu0 0.0
    %212 = vmatpush2.msra.mxu0 0.0
    %213 = vmatprep.subr.mxu0 0.0
    %214 = vmatpush2.msra.mxu0 0.0
    %215 = vmatprep.subr.mxu0 0.0
    %216 = vmatpush2.msra.mxu0 0.0
    %217 = vmatprep.subr.mxu0 0.0
    %218 = vmatpush2.msra.mxu0 0.0
    %219 = vmatprep.subr.mxu0 0.0
    %220 = vmatpush2.msra.mxu0 0.0
    %221 = vmatprep.subr.mxu0 0.0
    %222 = vmatpush2.msra.mxu0 0.0
    %223 = vmatprep.subr.mxu0 0.0
    %224 = vmatpush2.msra.mxu0 0.0
    %225 = vmatprep.subr.mxu0 0.0
    %226 = vmatpush2.msra.mxu0 0.0
    %227 = vmatprep.subr.mxu0 0.0
    %228 = vmatpush2.msra.mxu0 0.0
    %229 = vmatprep.subr.mxu0 0.0
    %230 = vmatpush2.msra.mxu0 0.0
    %231 = vmatprep.subr.mxu0 0.0
    %232 = vmatpush2.msra.mxu0 0.0
    %233 = vmatprep.subr.mxu0 0.0
    %234 = vmatpush2.msra.mxu0 0.0
    %235 = vmatprep.subr.mxu0 0.0
    %236 = vmatpush2.msra.mxu0 0.0
    %237 = vmatprep.subr.mxu0 0.0
    %238 = vmatpush2.msra.mxu0 0.0
    %239 = vmatprep.mubr.f32.mxu0 0.0
    %240 = vmatmul.mubr.f32.gmra.mxu0 %v171
    %v241 = vpop.f32.mrf.mxu0
    %v242 = vadd.f32 %v163, %v241
    %v243 = vpop.f32.mrf.mxu0
    %v244 = vadd.f32 %v163, %v243
    %245 = vmatprep.mubr.f32.mxu0 0.0
    %246 = vmatmul.mubr.f32.gmra.mxu0 %v173
    %v247 = vpop.f32.mrf.mxu0
    %v248 = vadd.f32 %v168, %v247
    %v249 = vpop.f32.mrf.mxu0
    %v250 = vadd.f32 %v168, %v249
    %251 = vdwg.mxu0
    %v252 = vmax.f32 %v242, 0.0
    %v253 = vmax.f32 %v244, 0.0
    %v254 = vmax.f32 %v248, 0.0
    %v255 = vmax.f32 %v250, 0.0
    %256 = vst [vmem:[%s3] sm:$0xff] %v252
    %257 = vst [vmem:[%s3 + $0x8] sm:$0xff] %v253
    %258 = vst [vmem:[%s3 + $0x10] sm:$0xff] %v254
    %259 = vst [vmem:[%s3 + $0x18] sm:$0xff] %v255
    // Predicated region
    $region18: #{depth_separable_conv2d.1} parent=1 // pred_check
      _
    $region19: #{depth_separable_conv2d.1} parent=1 // pred_check_branch
      %261 = sbr.rel (0) target = $region21
    $region20: #{depth_separable_conv2d.1} parent=1 // pred_region
      _
    $region21: #{depth_separable_conv2d.1} parent=1 // pred_fallthru
      _
    // Predicated region
    $region22: #{depth_separable_conv2d.1} parent=1 // pred_check
      _
    $region23: #{depth_separable_conv2d.1} parent=1 // pred_check_branch
      %263 = sbr.rel (0) target = $region25
    $region24: #{depth_separable_conv2d.1} parent=1 // pred_region
      _
    $region25: #{depth_separable_conv2d.1} parent=1 // pred_fallthru
      _
    %264 = vsyncpa [#allocation3], 1

</llo_original>
